<compile_context>
chip_gen: v5e
topology: v5e:2x2
jax: 0.10.0
libtpu: 0.0.40
codegen_flags: <defaults>
</compile_context>

<pallas_src>
import jax
import jax.numpy as jnp
from jax.experimental import pallas as pl
from jax.experimental.pallas import tpu as pltpu


_VMEM_LIMIT_BYTES = 32 * 1024 * 1024    # safe on v5e/v6e (128 MiB) and v7x (64 MiB)
_VMEM_BLOCK_BUDGET = 16 * 1024 * 1024   # budget for double-buffered in+out blocks


def _take_last_kernel_dense(x_ref, o_ref):
    # x_ref: (bb, H) -- the last time-step slab of bb batch rows (lane/sublane dense)
    # o_ref: (bb, H)
    o_ref[...] = x_ref[...]


def _take_last_kernel_fallback(x_ref, o_ref):
    # x_ref: (bb, 1, 1, H) -- last time-step of bb batch rows, T untiled leading axis
    # o_ref: (bb, H)
    o_ref[...] = x_ref[:, 0, 0, :]


def _round_up(a, m):
    return ((a + m - 1) // m) * m


def _pick_block_b(B, H, itemsize):
    """Batch block size: sublane-dense multiple, sized from a VMEM budget, capped so
    the grid has enough steps that the input DMA of step i+1 overlaps the output
    DMA of step i (a copy kernel has no compute to hide DMAs behind)."""
    sub = {1: 32, 2: 16}.get(itemsize, 8)            # sublane packing per dtype
    if B <= sub:
        return B                                     # one block == full batch dim
    # Double-buffered in + out blocks ~= 4 * bb * H * itemsize bytes.
    bb = max(sub, (_VMEM_BLOCK_BUDGET // (4 * H * itemsize)) // sub * sub)
    # Aim for >= ~4 grid steps while keeping blocks sublane-dense.
    bb = min(bb, _round_up(pl.cdiv(B, 4), sub))
    bb = min(bb, _round_up(B, sub))
    return bb


def take_last(x, *, block_b=None):
    """x: (B, T, H) -> x[:, -1, :] of shape (B, H) (PyTorch TakeLast.forward)."""
    B, T, H = x.shape
    itemsize = jnp.dtype(x.dtype).itemsize
    bb = block_b if block_b is not None else _pick_block_b(B, H, itemsize)
    grid = (pl.cdiv(B, bb),)   # ragged batch tail handled by Pallas block masking
    cparams = pltpu.CompilerParams(
        dimension_semantics=("parallel",),           # shard grid across both TCs on v7x
        vmem_limit_bytes=_VMEM_LIMIT_BYTES,
    )
    out_shape = jax.ShapeDtypeStruct((B, H), x.dtype)

    if H % 128 == 0:
        # Fast path: contiguous (free) view x -> (B, T*H).  Block (bb, H) at block
        # index (b, T-1) is exactly the last time-step of bb rows: sublane/lane
        # dense, unmasked stores, zero in-kernel relayout, no sublane padding.
        x2 = x.reshape(B, T * H)
        return pl.pallas_call(
            _take_last_kernel_dense,
            out_shape=out_shape,
            grid_spec=pltpu.PrefetchScalarGridSpec(
                num_scalar_prefetch=0,
                grid=grid,
                in_specs=[pl.BlockSpec((bb, H), lambda b: (b, T - 1))],
                out_specs=pl.BlockSpec((bb, H), lambda b: (b, 0)),
            ),
            compiler_params=cparams,
        )(x2)

    # Fallback for H % 128 != 0: keep T as a leading, untiled axis so the block's
    # last two dims (1, H) equal the full array dims (satisfies the (8,128) rule).
    # TODO(synk): for tiny H (< 128) plain x[:, -1, :] left to XLA fusion is cheaper
    # than any kernel launch; kept in Pallas here so every shape routes through it.
    x4 = x.reshape(B, T, 1, H)
    return pl.pallas_call(
        _take_last_kernel_fallback,
        out_shape=out_shape,
        grid_spec=pltpu.PrefetchScalarGridSpec(
            num_scalar_prefetch=0,
            grid=grid,
            in_specs=[pl.BlockSpec((bb, 1, 1, H), lambda b: (b, T - 1, 0, 0))],
            out_specs=pl.BlockSpec((bb, H), lambda b: (b, 0)),
        ),
        compiler_params=cparams,
    )(x4)


if __name__ == "__main__":
    key = jax.random.PRNGKey(0)
    k1, k2, k3 = jax.random.split(key, 3)

    # 1) Dense fast path: lane-dense H (multiple of 128), sublane-dense batch blocks.
    B, T, H = 16, 8, 128
    x = jax.random.normal(k1, (B, T, H), dtype=jnp.float32)
    out = take_last(x)
    jax.block_until_ready(out)
    assert out.shape == (B, H)
    assert jnp.array_equal(out, x[:, -1, :]), "take_last mismatch (dense path)"

    # 2) Dense fast path with a ragged batch tail (grid = cdiv(B, bb), bb = 8).
    B2, T2, H2 = 10, 4, 128
    x2 = jax.random.normal(k2, (B2, T2, H2), dtype=jnp.float32)
    out2 = take_last(x2)
    jax.block_until_ready(out2)
    assert out2.shape == (B2, H2)
    assert jnp.array_equal(out2, x2[:, -1, :]), "take_last mismatch (ragged batch)"

    # 3) Fallback path: small, non-128-aligned hidden dim.
    B3, T3, H3 = 2, 8, 32
    x3 = jax.random.normal(k3, (B3, T3, H3), dtype=jnp.float32)
    out3 = take_last(x3)
    jax.block_until_ready(out3)
    assert out3.shape == (B3, H3)
    assert jnp.array_equal(out3, x3[:, -1, :]), "take_last mismatch (fallback path)"

    print("KERNEL_OK")
</pallas_src>

<mosaic_0001>
module attributes {stable_mosaic.version = 11 : i64} {
  func.func @_take_last_kernel_dense(%arg0: i32, %arg1: memref<8x128xf32, #tpu.memory_space<vmem>>, %arg2: memref<8x128xf32, #tpu.memory_space<vmem>>) attributes {dimension_semantics = [#tpu.dimension_semantics<parallel>], iteration_bounds = array<i64: 2>, scalar_prefetch = 0 : i64, scratch_operands = 0 : i64, tpu.core_type = #tpu.core_type<tc>, window_params = [{transform_indices = @transform_0, window_bounds = array<i64: 8, 128>}, {transform_indices = @transform_1, window_bounds = array<i64: 8, 128>}]} {
    %c0 = arith.constant 0 : index
    %c0_0 = arith.constant 0 : index
    %0 = vector.load %arg1[%c0, %c0_0] : memref<8x128xf32, #tpu.memory_space<vmem>>, vector<8x128xf32>
    %c0_1 = arith.constant 0 : index
    %c0_2 = arith.constant 0 : index
    %1 = vector.load %arg2[%c0_1, %c0_2] : memref<8x128xf32, #tpu.memory_space<vmem>>, vector<8x128xf32>
    tpu.vector_store %arg2[%c0_1, %c0_2], %0 {strides = array<i32>} : memref<8x128xf32, #tpu.memory_space<vmem>>, vector<8x128xf32>,
    return
  }
  func.func @transform_0(%arg0: i32) -> (i32, i32) {
    %c7_i32 = arith.constant 7 : i32
    %c0_i32 = arith.constant 0 : i32
    return %arg0, %c7_i32 : i32, i32
  }
  func.func @transform_1(%arg0: i32) -> (i32, i32) {
    %c0_i32 = arith.constant 0 : i32
    %c0_i32_0 = arith.constant 0 : i32
    return %arg0, %c0_i32 : i32, i32
  }
}

</mosaic_0001>

<llo_original>
// kernel: tpu_custom_call.1
$region0: #{tpu_custom_call.1}
  #allocation0 [shape = 'u32[]', space=smem, size = 0x4, offset = 0x4, fixed_abs, tag = 'smem constant byte address 0x4 - core index']
  #allocation1 [shape = 'u32[72,128]{1,0:T(1,128)}', space=vmem, size = 0x9000, scoped, tag = 'internal scratch']
  %s0 = inlined_call_operand.hbm [shape: f32[16,1024], index: 0, kind: input, shape index: {}]
  %s1 = inlined_call_operand.hbm [shape: f32[16,128], index: 1, kind: output, shape index: {}]
  %s2 = sld [smem:[#allocation0]]
  $region41: #{tpu_custom_call.1} parent=0
    _
  %s4 = ssub.s32 1, %s2
  %s5 = scalar_select 0, %s4, %s2
  $region1: #{tpu_custom_call.1} parent=0
    #allocation2 [shape = 'u8[8192]{0}', space=vmem, size = 0x2000, scoped, tag = 'input window, operand 0']
    #allocation3 [shape = 's32[2]{0}', space=sflag, size = 0x8, scoped, tag = 'scoped memory for tpu_custom_call.1']
    #allocation4 [shape = 's32[2]{0}', space=sflag, size = 0x8, scoped, tag = 'scoped memory for tpu_custom_call.1']
    #allocation5 [shape = 'u8[8192]{0}', space=vmem, size = 0x2000, scoped, tag = 'output window, operand 0']
    %6 = vsyncpa [#allocation3], 0
    %s7 = scalar_lea.sflag [#allocation3], 1
    %8 = vsyncpa %s7, 0
    %9 = vsyncpa [#allocation4], 0
    %s10 = scalar_lea.sflag [#allocation4], 1
    %11 = vsyncpa %s10, 0
    loop: start=0, step=1, limit=4
    $region2: #{tpu_custom_call.1} parent=1 // loop_pre_header
      _
    $region3: #{tpu_custom_call.1} parent=1 // loop_header
      %s13 = sphi 0, %s17
      %p14 = scmp.ge.s32.totalorder %s13, 4
      %s23 = sphi 0, %s25
      %s26 = sphi 0, %s23
      %s27 = sphi 0, %s26
      %s43 = sphi 0, %s27
      %s49 = sphi 0, %s51
      %s52 = sphi 0, %s49
      %s53 = sphi 0, %s52
      %s69 = sphi 0, %s53
    $region4: #{tpu_custom_call.1} parent=1 // loop_header_branch
      %16 = sbr.rel (%p14) target = $region8
    $region5: #{tpu_custom_call.1} parent=1 // loop_body
      %s18 = ssub.s32 %s13, 1
      %s19 = ssub.s32 %s13, 2
      %s20 = sadd.s32 %s13, 1
      %s21 = ssub.s32 %s13, %s20
      %p22 = scmp.eq.s32.totalorder %s21, 0
      %s24 = sadd.s32 %s23, 1
      %s25 = scalar_select %p22, %s23, %s24
      %p28 = pneg %p22
      %p29 = scmp.eq.s32.totalorder %s13, 1
      %p30 = por %p28, %p29
      %p31 = scmp.ne.s32.totalorder %s23, %s26
      %p32 = scmp.eq.s32.totalorder %s13, 0
      %p33 = por %p31, %p32
      %p34 = scmp.ne.s32.totalorder %s23, %s26
      %p35 = scmp.eq.s32.totalorder %s18, 1
      %p36 = por %p34, %p35
      %p37 = scmp.ne.s32.totalorder %s26, %s27
      %p38 = scmp.eq.s32.totalorder %s18, 0
      %p39 = por %p37, %p38
      %p40 = scmp.ne.s32.totalorder %s26, %s27
      %p41 = scmp.eq.s32.totalorder %s19, 1
      %p42 = por %p40, %p41
      %p44 = scmp.ne.s32.totalorder %s27, %s43
      %p45 = scmp.eq.s32.totalorder %s19, 0
      %p46 = por %p44, %p45
      %s47 = ssub.s32 %s13, %s20
      %p48 = scmp.eq.s32.totalorder %s47, 0
      %s50 = sadd.s32 %s49, 1
      %s51 = scalar_select %p48, %s49, %s50
      %p54 = pneg %p48
      %p55 = scmp.eq.s32.totalorder %s13, 1
      %p56 = por %p54, %p55
      %p57 = scmp.ne.s32.totalorder %s49, %s52
      %p58 = scmp.eq.s32.totalorder %s13, 0
      %p59 = por %p57, %p58
      %p60 = scmp.ne.s32.totalorder %s49, %s52
      %p61 = scmp.eq.s32.totalorder %s18, 1
      %p62 = por %p60, %p61
      %p63 = scmp.ne.s32.totalorder %s52, %s53
      %p64 = scmp.eq.s32.totalorder %s18, 0
      %p65 = por %p63, %p64
      %p66 = scmp.ne.s32.totalorder %s52, %s53
      %p67 = scmp.eq.s32.totalorder %s19, 1
      %p68 = por %p66, %p67
      %p70 = scmp.ne.s32.totalorder %s53, %s69
      %p71 = scmp.eq.s32.totalorder %s19, 0
      %p72 = por %p70, %p71
      %p73 = scmp.le.s32.totalorder 1, %s13
      %p74 = scmp.lt.s32.totalorder %s13, 3
      %p75 = pnand %p73, %p74
      %p76 = pneg %p75
      // Predicated region
      $region9: #{tpu_custom_call.1} parent=5 // pred_check
        _
      $region10: #{tpu_custom_call.1} parent=5 // pred_check_branch
        %78 = sbr.rel (%p75) target = $region12
      $region11: #{tpu_custom_call.1} parent=5 // pred_region
        %s79 = ssub.s32 %s13, 1
      $region12: #{tpu_custom_call.1} parent=5 // pred_fallthru
        _
      %p80 = scmp.lt.s32.totalorder %s13, 2
      // Predicated region
      $region13: #{tpu_custom_call.1} parent=5 // pred_check
        %p81 = pneg %p80
      $region14: #{tpu_custom_call.1} parent=5 // pred_check_branch
        %83 = sbr.rel (%p81) target = $region16
      $region15: #{tpu_custom_call.1} parent=5 // pred_region
        // Predicated region
        $region17: #{tpu_custom_call.1} parent=15 // pred_check
          %p84 = pneg %p33
        $region18: #{tpu_custom_call.1} parent=15 // pred_check_branch
          %86 = sbr.rel (%p84) target = $region20
        $region19: #{tpu_custom_call.1} parent=15 // pred_region
          %s87 = sand.u32 %s23, 1
          %s88 = scalar_lea.sflag [#allocation3], %s87
          %s89 = sand.u32 %s23, 1
          %s90 = smul.addr %s89, 8
          %s91 = scalar_lea.vmem [#allocation2], %s90
          %93 = vsyncadd %s88, 0
          %s94 = smul.addr %s13, 8
          %s95 = sadd.s32 7, %s94
          %s96 = smul.addr %s95, 8
          %s97 = scalar_lea.hbm %s0, %s96
          %s99 = sshll.u32 %s97, 4
          %s100 = int_to_ptr.hbm [resolvable:$true] %s99
          %s101 = sshll.u32 %s91, 4
          %s102 = int_to_ptr.vmem [resolvable:$true] %s101
          %104 = dma.hbm_to_vmem [thread:$0]  %s100, 128, %s102, %s88
        $region20: #{tpu_custom_call.1} parent=15 // pred_fallthru
          _
      $region16: #{tpu_custom_call.1} parent=5 // pred_fallthru
        _
      %p105 = scmp.le.s32.totalorder 1, %s13
      %p106 = scmp.lt.s32.totalorder %s13, 3
      %p107 = pnand %p105, %p106
      %p108 = pneg %p107
      // Predicated region
      $region21: #{tpu_custom_call.1} parent=5 // pred_check
        _
      $region22: #{tpu_custom_call.1} parent=5 // pred_check_branch
        %110 = sbr.rel (%p107) target = $region24
      $region23: #{tpu_custom_call.1} parent=5 // pred_region
        %s111 = ssub.s32 %s13, 1
        %s112 = sand.u32 %s26, 1
        %s113 = scalar_lea.sflag [#allocation3], %s112
        %s114 = sand.u32 %s26, 1
        %s115 = smul.addr %s114, 8
        %s116 = scalar_lea.vmem [#allocation2], %s115
        // Predicated region
        $region25: #{tpu_custom_call.1} parent=23 // pred_check
          %p117 = pneg %p39
        $region26: #{tpu_custom_call.1} parent=23 // pred_check_branch
          %119 = sbr.rel (%p117) target = $region28
        $region27: #{tpu_custom_call.1} parent=23 // pred_region
          %121 = dma.done %s113, 128
        $region28: #{tpu_custom_call.1} parent=23 // pred_fallthru
          _
        %s122 = sand.u32 %s26, 1
        %s123 = scalar_lea.sflag [#allocation3], %s122
        %s124 = sand.u32 %s26, 1
        %s125 = smul.addr %s124, 8
        %s126 = scalar_lea.vmem [#allocation2], %s125
        %p127 = pneg %p39
        %p128 = pneg %p36
        %p129 = pneg %p65
        %p130 = pneg %p62
        %s131 = sand.u32 %s52, 1
        %s132 = scalar_lea.sflag [#allocation4], %s131
        %s133 = sand.u32 %s52, 1
        %s134 = smul.addr %s133, 8
        %s135 = scalar_lea.vmem [#allocation5], %s134
        %v136 = vld [vmem:[%s116] sm:$0xff]
        %137 = vst [vmem:[%s135] sm:$0xff] %v136
        %s138 = sand.u32 %s52, 1
        %s139 = scalar_lea.sflag [#allocation4], %s138
        %s140 = sand.u32 %s52, 1
        %s141 = smul.addr %s140, 8
        %s142 = scalar_lea.vmem [#allocation5], %s141
        // Predicated region
        $region29: #{tpu_custom_call.1} parent=23 // pred_check
          %p143 = pneg %p62
        $region30: #{tpu_custom_call.1} parent=23 // pred_check_branch
          %145 = sbr.rel (%p143) target = $region32
        $region31: #{tpu_custom_call.1} parent=23 // pred_region
          %147 = vsyncadd %s139, 0
          %s148 = smul.addr %s18, 8
          %s149 = scalar_lea.hbm %s1, %s148
          %s151 = sshll.u32 %s142, 4
          %s152 = int_to_ptr.vmem [resolvable:$true] %s151
          %s153 = sshll.u32 %s149, 4
          %s154 = int_to_ptr.hbm [resolvable:$true] %s153
          %156 = dma.vmem_to_hbm [thread:$0]  %s152, 128, %s154, %s139
        $region32: #{tpu_custom_call.1} parent=23 // pred_fallthru
          _
      $region24: #{tpu_custom_call.1} parent=5 // pred_fallthru
        _
      %p157 = scmp.le.s32.totalorder 2, %s13
      // Predicated region
      $region33: #{tpu_custom_call.1} parent=5 // pred_check
        %p158 = pneg %p157
      $region34: #{tpu_custom_call.1} parent=5 // pred_check_branch
        %160 = sbr.rel (%p158) target = $region36
      $region35: #{tpu_custom_call.1} parent=5 // pred_region
        %s161 = ssub.s32 %s13, 2
        // Predicated region
        $region37: #{tpu_custom_call.1} parent=35 // pred_check
          %p162 = pneg %p68
        $region38: #{tpu_custom_call.1} parent=35 // pred_check_branch
          %164 = sbr.rel (%p162) target = $region40
        $region39: #{tpu_custom_call.1} parent=35 // pred_region
          %s165 = sand.u32 %s53, 1
          %s166 = scalar_lea.sflag [#allocation4], %s165
          %s167 = sand.u32 %s53, 1
          %s168 = smul.addr %s167, 8
          %s169 = scalar_lea.vmem [#allocation5], %s168
          %171 = dma.done %s166, 128
        $region40: #{tpu_custom_call.1} parent=35 // pred_fallthru
          _
      $region36: #{tpu_custom_call.1} parent=5 // pred_fallthru
        _
    $region6: #{tpu_custom_call.1} parent=1 // loop_footer
      %s17 = sadd.s32 1, %s13
    $region7: #{tpu_custom_call.1} parent=1 // loop_footer_branch
      %12 = sbr.rel target = $region3
    $region8: #{tpu_custom_call.1} parent=1 // loop_exit
      _
    %172 = vsyncpa [#allocation3], 1
    %s173 = scalar_lea.sflag [#allocation3], 1
    %174 = vsyncpa %s173, 1
    %175 = vsyncpa [#allocation4], 1
    %s176 = scalar_lea.sflag [#allocation4], 1
    %177 = vsyncpa %s176, 1

</llo_original>
